<compile_context>
chip_gen: v6e
topology: v6e:2x2x1
jax: 0.10.0
libtpu: 0.0.40
codegen_flags: <defaults>
</compile_context>

<pallas_src>
import functools

import jax
import jax.numpy as jnp
from jax.experimental import pallas as pl
from jax.experimental.pallas import tpu as pltpu


NEG_SLOPE = 0.01   # F.leaky_relu default
N_OUT = 3


def _leaky_relu(v):
    return jnp.where(v >= 0, v, NEG_SLOPE * v)


def mlp_kernel(x_ref, w1_ref, b1_ref, w2_ref, b2_ref, w3_ref, b3_ref,
               w4_ref, b4_ref, o_ref):
    """Fused 4-layer MLP forward for one (tb, input_dim) batch tile.

    Weights/biases are the same VMEM-resident blocks on every grid step; only
    the x tile and the (tb, 3) output tile stream through HBM.
    """
    # Cast the tile to w1's dtype: when w1 is bf16 this drives the MXU in its
    # native bf16 mode (f32 accumulation kept via preferred_element_type).
    x = x_ref[...].astype(w1_ref.dtype)

    h = jnp.dot(x, w1_ref[...], preferred_element_type=jnp.float32) + b1_ref[...]
    h = _leaky_relu(h)

    h = jnp.dot(h, w2_ref[...], preferred_element_type=jnp.float32) + b2_ref[...]
    h = _leaky_relu(h)

    h = jnp.dot(h, w3_ref[...], preferred_element_type=jnp.float32) + b3_ref[...]
    h = _leaky_relu(h)
    # nn.Dropout(0.2) is identity in eval mode (inference semantics).

    o_ref[...] = jnp.dot(h, w4_ref[...], preferred_element_type=jnp.float32) + b4_ref[...]


def _weight_bytes(input_dim):
    return 4 * (input_dim * 128 + 128 + 128 * 64 + 64
                + 64 * 32 + 32 + 32 * N_OUT + N_OUT)


def _vmem_limit_bytes():
    """~75% of physical VMEM (48 MiB on 64-MiB v7x, ~96 MiB on v5e/v6e)."""
    cap = None
    try:
        cap = getattr(pltpu.get_tpu_info(), "vmem_capacity_bytes", None)
    except Exception:
        cap = None
    if not cap or cap <= 0:
        cap = 64 * 1024 * 1024          # conservative fallback (v7x-sized)
    return int(min(0.75 * cap, 100 * 1024 * 1024))


def _pick_tb(batch, input_dim, vmem_limit, x_itemsize):
    """Largest batch tile such that double-buffered x/out tiles plus
    (conservatively double-buffered) resident weights fit the VMEM budget."""
    per_row = (2 * input_dim * x_itemsize      # double-buffered x tile
               + 2 * N_OUT * 4                 # double-buffered output tile
               + 4 * (128 + 64 + 32 + 128))    # intermediate-activation headroom
    budget = int(0.6 * vmem_limit) - 2 * _weight_bytes(input_dim)
    tb = budget // per_row if budget > 0 else 8
    tb = max(8, min(2048, (tb // 8) * 8))
    return tb


@functools.partial(jax.jit, static_argnames=("tb", "use_bf16_layer1"))
def rule_augmented_mlp(x, params, *, tb=None, use_bf16_layer1=False):
    """x: [batch, input_dim] (f32 or bf16); params: dict of weights/biases.

    Returns [batch, 3] float32 matching the PyTorch module in eval mode.
    """
    batch, input_dim = x.shape

    w1, b1 = params["w1"], params["b1"]
    w2, b2 = params["w2"], params["b2"]
    w3, b3 = params["w3"], params["b3"]
    w4, b4 = params["w4"], params["b4"]

    if use_bf16_layer1:
        # w1 is tiny and VMEM-resident; the x tile is cast in-kernel (no extra
        # HBM pass). Pass bf16 x at the API boundary to also halve the x read.
        w1 = w1.astype(jnp.bfloat16)

    vmem_limit = _vmem_limit_bytes()

    # ---- batch tile: multiple of 8 sublanes, or the full batch ---------------
    if tb is None:
        tb = _pick_tb(batch, input_dim, vmem_limit, x.dtype.itemsize)
    if tb >= batch:
        tb = batch                      # single full-extent tile (always legal)
    else:
        tb = max(8, (tb // 8) * 8)

    grid = (pl.cdiv(batch, tb),)        # ragged last tile handled by Pallas masking

    # Weight/bias blocks: full array, same block every grid step -> VMEM-resident.
    def resident(a):
        return pl.BlockSpec(a.shape, lambda i: (0,) * a.ndim)

    wbytes = _weight_bytes(input_dim)
    flops = 2 * batch * (input_dim * 128 + 128 * 64 + 64 * 32 + 32 * N_OUT)
    bytes_accessed = (batch * input_dim * x.dtype.itemsize
                      + batch * N_OUT * 4 + wbytes)

    out = pl.pallas_call(
        mlp_kernel,
        out_shape=jax.ShapeDtypeStruct((batch, N_OUT), jnp.float32),
        grid=grid,
        in_specs=[
            pl.BlockSpec((tb, input_dim), lambda i: (i, 0)),   # x: streamed per tile
            resident(w1), resident(b1),
            resident(w2), resident(b2),
            resident(w3), resident(b3),
            resident(w4), resident(b4),
        ],
        out_specs=pl.BlockSpec((tb, N_OUT), lambda i: (i, 0)),  # true 3-wide output
        compiler_params=pltpu.CompilerParams(
            dimension_semantics=("parallel",),                  # megacore sharding
            vmem_limit_bytes=vmem_limit,
        ),
        cost_estimate=pl.CostEstimate(
            flops=flops, transcendentals=0, bytes_accessed=bytes_accessed),
    )(x, w1, b1, w2, b2, w3, b3, w4, b4)

    return out


def init_params(key, input_dim):
    """Deterministic PyTorch-style uniform(-1/sqrt(fan_in), 1/sqrt(fan_in)) init."""
    dims = [(input_dim, 128), (128, 64), (64, 32), (32, N_OUT)]
    params = {}
    for i, (fan_in, fan_out) in enumerate(dims, start=1):
        key, kw, kb = jax.random.split(key, 3)
        bound = 1.0 / jnp.sqrt(jnp.float32(fan_in))
        params[f"w{i}"] = jax.random.uniform(
            kw, (fan_in, fan_out), jnp.float32, -bound, bound)
        params[f"b{i}"] = jax.random.uniform(
            kb, (1, fan_out), jnp.float32, -bound, bound)
    return params


def reference_forward(x, params):
    """Pure-JAX reference for correctness check."""
    h = _leaky_relu(x @ params["w1"] + params["b1"])
    h = _leaky_relu(h @ params["w2"] + params["b2"])
    h = _leaky_relu(h @ params["w3"] + params["b3"])
    return h @ params["w4"] + params["b4"]


if __name__ == "__main__":
    key = jax.random.PRNGKey(0)
    key, kx = jax.random.split(key)

    batch, input_dim = 8, 32
    x = jax.random.normal(kx, (batch, input_dim), jnp.float32)
    params = init_params(key, input_dim)

    out = jax.block_until_ready(rule_augmented_mlp(x, params))
    ref = reference_forward(x, params)
    assert out.shape == (batch, N_OUT)
    assert jnp.allclose(out, ref, atol=1e-5, rtol=1e-5), "mismatch vs reference"

    # Multi-tile ragged grid (batch not a multiple of tb): no wrapper padding,
    # Pallas masks the partial last tile.
    key, kx2 = jax.random.split(key)
    x_big = jax.random.normal(kx2, (1030, input_dim), jnp.float32)
    out_big = jax.block_until_ready(rule_augmented_mlp(x_big, params, tb=512))
    ref_big = reference_forward(x_big, params)
    assert out_big.shape == (1030, N_OUT)
    assert jnp.allclose(out_big, ref_big, atol=1e-4, rtol=1e-4), "mismatch (big batch)"

    # bf16 layer-1 matmul path (MXU-native); looser tolerance vs f32 reference.
    out_bf16 = jax.block_until_ready(
        rule_augmented_mlp(x_big, params, tb=512, use_bf16_layer1=True))
    assert out_bf16.shape == (1030, N_OUT)
    assert jnp.allclose(out_bf16, ref_big, atol=5e-2, rtol=5e-2), "mismatch (bf16 path)"

    print("KERNEL_OK")
</pallas_src>

<mosaic_0001>
module attributes {stable_mosaic.version = 11 : i64} {
  func.func @mlp_kernel(%arg0: i32, %arg1: memref<8x32xf32, #tpu.memory_space<vmem>>, %arg2: memref<32x128xf32, #tpu.memory_space<vmem>>, %arg3: memref<1x128xf32, #tpu.memory_space<vmem>>, %arg4: memref<128x64xf32, #tpu.memory_space<vmem>>, %arg5: memref<1x64xf32, #tpu.memory_space<vmem>>, %arg6: memref<64x32xf32, #tpu.memory_space<vmem>>, %arg7: memref<1x32xf32, #tpu.memory_space<vmem>>, %arg8: memref<32x3xf32, #tpu.memory_space<vmem>>, %arg9: memref<1x3xf32, #tpu.memory_space<vmem>>, %arg10: memref<8x3xf32, #tpu.memory_space<vmem>>) attributes {dimension_semantics = [#tpu.dimension_semantics<parallel>], iteration_bounds = array<i64: 1>, scalar_prefetch = 0 : i64, scratch_operands = 0 : i64, tpu.core_type = #tpu.core_type<tc>, window_params = [{transform_indices = @transform_0, window_bounds = array<i64: 8, 32>}, {pipeline_mode = #tpu.pipeline_mode<synchronous>, transform_indices = @transform_1, window_bounds = array<i64: 32, 128>}, {pipeline_mode = #tpu.pipeline_mode<synchronous>, transform_indices = @transform_2, window_bounds = array<i64: 1, 128>}, {pipeline_mode = #tpu.pipeline_mode<synchronous>, transform_indices = @transform_3, window_bounds = array<i64: 128, 64>}, {pipeline_mode = #tpu.pipeline_mode<synchronous>, transform_indices = @transform_4, window_bounds = array<i64: 1, 64>}, {pipeline_mode = #tpu.pipeline_mode<synchronous>, transform_indices = @transform_5, window_bounds = array<i64: 64, 32>}, {pipeline_mode = #tpu.pipeline_mode<synchronous>, transform_indices = @transform_6, window_bounds = array<i64: 1, 32>}, {pipeline_mode = #tpu.pipeline_mode<synchronous>, transform_indices = @transform_7, window_bounds = array<i64: 32, 3>}, {pipeline_mode = #tpu.pipeline_mode<synchronous>, transform_indices = @transform_8, window_bounds = array<i64: 1, 3>}, {transform_indices = @transform_9, window_bounds = array<i64: 8, 3>}]} {
    %c0 = arith.constant 0 : index
    %c0_0 = arith.constant 0 : index
    %0 = vector.load %arg1[%c0, %c0_0] : memref<8x32xf32, #tpu.memory_space<vmem>>, vector<8x32xf32>
    %c0_1 = arith.constant 0 : index
    %c0_2 = arith.constant 0 : index
    %1 = vector.load %arg2[%c0_1, %c0_2] : memref<32x128xf32, #tpu.memory_space<vmem>>, vector<32x128xf32>
    %cst = arith.constant dense<0.000000e+00> : vector<8x128xf32>
    %2 = tpu.matmul %0, %1, %cst {dimension_numbers = #tpu.dot_dimension_numbers<[1], [0], [0], [1], [0, 0, 1, 1], [], []>} : vector<8x32xf32>, vector<32x128xf32>, vector<8x128xf32> -> vector<8x128xf32>
    %c0_3 = arith.constant 0 : index
    %c0_4 = arith.constant 0 : index
    %3 = vector.load %arg3[%c0_3, %c0_4] : memref<1x128xf32, #tpu.memory_space<vmem>>, vector<1x128xf32>
    %4 = vector.broadcast %3 : vector<1x128xf32> to vector<8x128xf32>
    %5 = arith.addf %2, %4 : vector<8x128xf32>
    %cst_5 = arith.constant 0.000000e+00 : f32
    %6 = vector.broadcast %cst_5 : f32 to vector<8x128xf32>
    %7 = arith.cmpf oge, %5, %6 : vector<8x128xf32>
    %cst_6 = arith.constant 0.00999999977 : f32
    %8 = vector.broadcast %cst_6 : f32 to vector<8x128xf32>
    %9 = arith.mulf %8, %5 : vector<8x128xf32>
    %10 = arith.select %7, %5, %9 : vector<8x128xi1>, vector<8x128xf32>
    %c0_7 = arith.constant 0 : index
    %c0_8 = arith.constant 0 : index
    %11 = vector.load %arg4[%c0_7, %c0_8] : memref<128x64xf32, #tpu.memory_space<vmem>>, vector<128x64xf32>
    %cst_9 = arith.constant dense<0.000000e+00> : vector<8x64xf32>
    %12 = tpu.matmul %10, %11, %cst_9 {dimension_numbers = #tpu.dot_dimension_numbers<[1], [0], [0], [1], [0, 0, 1, 1], [], []>} : vector<8x128xf32>, vector<128x64xf32>, vector<8x64xf32> -> vector<8x64xf32>
    %c0_10 = arith.constant 0 : index
    %c0_11 = arith.constant 0 : index
    %13 = vector.load %arg5[%c0_10, %c0_11] : memref<1x64xf32, #tpu.memory_space<vmem>>, vector<1x64xf32>
    %14 = vector.broadcast %13 : vector<1x64xf32> to vector<8x64xf32>
    %15 = arith.addf %12, %14 : vector<8x64xf32>
    %cst_12 = arith.constant 0.000000e+00 : f32
    %16 = vector.broadcast %cst_12 : f32 to vector<8x64xf32>
    %17 = arith.cmpf oge, %15, %16 : vector<8x64xf32>
    %cst_13 = arith.constant 0.00999999977 : f32
    %18 = vector.broadcast %cst_13 : f32 to vector<8x64xf32>
    %19 = arith.mulf %18, %15 : vector<8x64xf32>
    %20 = arith.select %17, %15, %19 : vector<8x64xi1>, vector<8x64xf32>
    %c0_14 = arith.constant 0 : index
    %c0_15 = arith.constant 0 : index
    %21 = vector.load %arg6[%c0_14, %c0_15] : memref<64x32xf32, #tpu.memory_space<vmem>>, vector<64x32xf32>
    %cst_16 = arith.constant dense<0.000000e+00> : vector<8x32xf32>
    %22 = tpu.matmul %20, %21, %cst_16 {dimension_numbers = #tpu.dot_dimension_numbers<[1], [0], [0], [1], [0, 0, 1, 1], [], []>} : vector<8x64xf32>, vector<64x32xf32>, vector<8x32xf32> -> vector<8x32xf32>
    %c0_17 = arith.constant 0 : index
    %c0_18 = arith.constant 0 : index
    %23 = vector.load %arg7[%c0_17, %c0_18] : memref<1x32xf32, #tpu.memory_space<vmem>>, vector<1x32xf32>
    %24 = vector.broadcast %23 : vector<1x32xf32> to vector<8x32xf32>
    %25 = arith.addf %22, %24 : vector<8x32xf32>
    %cst_19 = arith.constant 0.000000e+00 : f32
    %26 = vector.broadcast %cst_19 : f32 to vector<8x32xf32>
    %27 = arith.cmpf oge, %25, %26 : vector<8x32xf32>
    %cst_20 = arith.constant 0.00999999977 : f32
    %28 = vector.broadcast %cst_20 : f32 to vector<8x32xf32>
    %29 = arith.mulf %28, %25 : vector<8x32xf32>
    %30 = arith.select %27, %25, %29 : vector<8x32xi1>, vector<8x32xf32>
    %c0_21 = arith.constant 0 : index
    %c0_22 = arith.constant 0 : index
    %31 = vector.load %arg8[%c0_21, %c0_22] : memref<32x3xf32, #tpu.memory_space<vmem>>, vector<32x3xf32>
    %cst_23 = arith.constant dense<0.000000e+00> : vector<8x3xf32>
    %32 = tpu.matmul %30, %31, %cst_23 {dimension_numbers = #tpu.dot_dimension_numbers<[1], [0], [0], [1], [0, 0, 1, 1], [], []>} : vector<8x32xf32>, vector<32x3xf32>, vector<8x3xf32> -> vector<8x3xf32>
    %c0_24 = arith.constant 0 : index
    %c0_25 = arith.constant 0 : index
    %33 = vector.load %arg9[%c0_24, %c0_25] : memref<1x3xf32, #tpu.memory_space<vmem>>, vector<1x3xf32>
    %34 = vector.broadcast %33 : vector<1x3xf32> to vector<8x3xf32>
    %35 = arith.addf %32, %34 : vector<8x3xf32>
    %c0_26 = arith.constant 0 : index
    %c0_27 = arith.constant 0 : index
    %36 = vector.load %arg10[%c0_26, %c0_27] : memref<8x3xf32, #tpu.memory_space<vmem>>, vector<8x3xf32>
    tpu.vector_store %arg10[%c0_26, %c0_27], %35 {strides = array<i32>} : memref<8x3xf32, #tpu.memory_space<vmem>>, vector<8x3xf32>,
    return
  }
  func.func @transform_0(%arg0: i32) -> (i32, i32) {
    %c0_i32 = arith.constant 0 : i32
    %c0_i32_0 = arith.constant 0 : i32
    return %arg0, %c0_i32 : i32, i32
  }
  func.func @transform_1(%arg0: i32) -> (i32, i32) {
    %c0_i32 = arith.constant 0 : i32
    %c0_i32_0 = arith.constant 0 : i32
    %c0_i32_1 = arith.constant 0 : i32
    return %c0_i32, %c0_i32_0 : i32, i32
  }
  func.func @transform_2(%arg0: i32) -> (i32, i32) {
    %c0_i32 = arith.constant 0 : i32
    %c0_i32_0 = arith.constant 0 : i32
    %c0_i32_1 = arith.constant 0 : i32
    return %c0_i32, %c0_i32_0 : i32, i32
  }
  func.func @transform_3(%arg0: i32) -> (i32, i32) {
    %c0_i32 = arith.constant 0 : i32
    %c0_i32_0 = arith.constant 0 : i32
    %c0_i32_1 = arith.constant 0 : i32
    return %c0_i32, %c0_i32_0 : i32, i32
  }
  func.func @transform_4(%arg0: i32) -> (i32, i32) {
    %c0_i32 = arith.constant 0 : i32
    %c0_i32_0 = arith.constant 0 : i32
    %c0_i32_1 = arith.constant 0 : i32
    return %c0_i32, %c0_i32_0 : i32, i32
  }
  func.func @transform_5(%arg0: i32) -> (i32, i32) {
    %c0_i32 = arith.constant 0 : i32
    %c0_i32_0 = arith.constant 0 : i32
    %c0_i32_1 = arith.constant 0 : i32
    return %c0_i32, %c0_i32_0 : i32, i32
  }
  func.func @transform_6(%arg0: i32) -> (i32, i32) {
    %c0_i32 = arith.constant 0 : i32
    %c0_i32_0 = arith.constant 0 : i32
    %c0_i32_1 = arith.constant 0 : i32
    return %c0_i32, %c0_i32_0 : i32, i32
  }
  func.func @transform_7(%arg0: i32) -> (i32, i32) {
    %c0_i32 = arith.constant 0 : i32
    %c0_i32_0 = arith.constant 0 : i32
    %c0_i32_1 = arith.constant 0 : i32
    return %c0_i32, %c0_i32_0 : i32, i32
  }
  func.func @transform_8(%arg0: i32) -> (i32, i32) {
    %c0_i32 = arith.constant 0 : i32
    %c0_i32_0 = arith.constant 0 : i32
    %c0_i32_1 = arith.constant 0 : i32
    return %c0_i32, %c0_i32_0 : i32, i32
  }
  func.func @transform_9(%arg0: i32) -> (i32, i32) {
    %c0_i32 = arith.constant 0 : i32
    %c0_i32_0 = arith.constant 0 : i32
    return %arg0, %c0_i32 : i32, i32
  }
}

</mosaic_0001>

<llo_original>
// kernel: rule_augmented_mlp.1
$region0: #{rule_augmented_mlp.1}
  #allocation0 [shape = 'u32[]', space=smem, size = 0x4, offset = 0x4, fixed_abs, tag = 'smem constant byte address 0x4 - core index']
  #allocation1 [shape = 'u32[144,128]{1,0:T(1,128)}', space=vmem, size = 0x12000, scoped, tag = 'internal scratch']
  %s0 = inlined_call_operand.vmem [shape: f32[8,32], index: 0, kind: input, shape index: {}]
  %s1 = inlined_call_operand.vmem [shape: f32[32,128], index: 1, kind: input, shape index: {}]
  %s2 = inlined_call_operand.vmem [shape: f32[1,128], index: 2, kind: input, shape index: {}]
  %s3 = inlined_call_operand.vmem [shape: f32[128,64], index: 3, kind: input, shape index: {}]
  %s4 = inlined_call_operand.vmem [shape: f32[1,64], index: 4, kind: input, shape index: {}]
  %s5 = inlined_call_operand.vmem [shape: f32[64,32], index: 5, kind: input, shape index: {}]
  %s6 = inlined_call_operand.vmem [shape: f32[1,32], index: 6, kind: input, shape index: {}]
  %s7 = inlined_call_operand.vmem [shape: f32[32,3], index: 7, kind: input, shape index: {}]
  %s8 = inlined_call_operand.vmem [shape: f32[1,3], index: 8, kind: input, shape index: {}]
  %s9 = inlined_call_operand.vmem [shape: f32[8,3], index: 9, kind: output, shape index: {}]
  %s10 = sld [smem:[#allocation0]]
  $region46: #{rule_augmented_mlp.1} parent=0
    _
  %s12 = ssub.s32 1, %s10
  %s13 = scalar_select 0, %s12, %s10
  // Predicated region
  $region2: #{rule_augmented_mlp.1} parent=0 // pred_check
    _
  $region3: #{rule_augmented_mlp.1} parent=0 // pred_check_branch
    %15 = sbr.rel (0) target = $region5
  $region4: #{rule_augmented_mlp.1} parent=0 // pred_region
    _
  $region5: #{rule_augmented_mlp.1} parent=0 // pred_fallthru
    _
  // Predicated region
  $region6: #{rule_augmented_mlp.1} parent=0 // pred_check
    _
  $region7: #{rule_augmented_mlp.1} parent=0 // pred_check_branch
    %17 = sbr.rel (0) target = $region9
  $region8: #{rule_augmented_mlp.1} parent=0 // pred_region
    _
  $region9: #{rule_augmented_mlp.1} parent=0 // pred_fallthru
    _
  // Predicated region
  $region10: #{rule_augmented_mlp.1} parent=0 // pred_check
    _
  $region11: #{rule_augmented_mlp.1} parent=0 // pred_check_branch
    %19 = sbr.rel (0) target = $region13
  $region12: #{rule_augmented_mlp.1} parent=0 // pred_region
    _
  $region13: #{rule_augmented_mlp.1} parent=0 // pred_fallthru
    _
  // Predicated region
  $region14: #{rule_augmented_mlp.1} parent=0 // pred_check
    _
  $region15: #{rule_augmented_mlp.1} parent=0 // pred_check_branch
    %21 = sbr.rel (0) target = $region17
  $region16: #{rule_augmented_mlp.1} parent=0 // pred_region
    _
  $region17: #{rule_augmented_mlp.1} parent=0 // pred_fallthru
    _
  // Predicated region
  $region18: #{rule_augmented_mlp.1} parent=0 // pred_check
    _
  $region19: #{rule_augmented_mlp.1} parent=0 // pred_check_branch
    %23 = sbr.rel (0) target = $region21
  $region20: #{rule_augmented_mlp.1} parent=0 // pred_region
    _
  $region21: #{rule_augmented_mlp.1} parent=0 // pred_fallthru
    _
  // Predicated region
  $region22: #{rule_augmented_mlp.1} parent=0 // pred_check
    _
  $region23: #{rule_augmented_mlp.1} parent=0 // pred_check_branch
    %25 = sbr.rel (0) target = $region25
  $region24: #{rule_augmented_mlp.1} parent=0 // pred_region
    _
  $region25: #{rule_augmented_mlp.1} parent=0 // pred_fallthru
    _
  // Predicated region
  $region26: #{rule_augmented_mlp.1} parent=0 // pred_check
    _
  $region27: #{rule_augmented_mlp.1} parent=0 // pred_check_branch
    %27 = sbr.rel (0) target = $region29
  $region28: #{rule_augmented_mlp.1} parent=0 // pred_region
    _
  $region29: #{rule_augmented_mlp.1} parent=0 // pred_fallthru
    _
  // Predicated region
  $region30: #{rule_augmented_mlp.1} parent=0 // pred_check
    _
  $region31: #{rule_augmented_mlp.1} parent=0 // pred_check_branch
    %29 = sbr.rel (0) target = $region33
  $region32: #{rule_augmented_mlp.1} parent=0 // pred_region
    _
  $region33: #{rule_augmented_mlp.1} parent=0 // pred_fallthru
    _
  // Predicated region
  $region34: #{rule_augmented_mlp.1} parent=0 // pred_check
    _
  $region35: #{rule_augmented_mlp.1} parent=0 // pred_check_branch
    %31 = sbr.rel (0) target = $region37
  $region36: #{rule_augmented_mlp.1} parent=0 // pred_region
    _
  $region37: #{rule_augmented_mlp.1} parent=0 // pred_fallthru
    _
  %v32 = vld [vmem:[%s0] sm:$0xff]
  %v33 = vld [vmem:[%s1] sm:$0xff]
  %v34 = vld [vmem:[%s1 + $0x8] sm:$0xff]
  %v35 = vld [vmem:[%s1 + $0x10] sm:$0xff]
  %v36 = vld [vmem:[%s1 + $0x18] sm:$0xff]
  %v37 = vld [vmem:[%s2] sm:$0x1]
  %v39 = vlaneseq
  %v40 = vshrl.u32 %v39, 7
  %v41 = vsub.s32 0, %v40
  %v42 = vrot.slane %v37, %v41
  %vm44 = vcmask 261120
  %v46 = vsel %vm44, %v32, 0
  %48 = vmatprep.subr.mxu0 0.0
  %49 = vmatpush1.msra.mxu0 0.0
  %50 = vmatprep.subr.mxu0 0.0
  %51 = vmatpush1.msra.mxu0 0.0
  %52 = vmatprep.subr.mxu0 0.0
  %53 = vmatpush1.msra.mxu0 0.0
  %54 = vmatprep.subr.mxu0 0.0
  %55 = vmatpush1.msra.mxu0 0.0
  %56 = vmatprep.subr.mxu0 0.0
  %57 = vmatpush1.msra.mxu0 0.0
  %58 = vmatprep.subr.mxu0 0.0
  %59 = vmatpush1.msra.mxu0 0.0
  %60 = vmatprep.subr.mxu0 0.0
  %61 = vmatpush1.msra.mxu0 0.0
  %62 = vmatprep.subr.mxu0 0.0
  %63 = vmatpush1.msra.mxu0 0.0
  %64 = vmatprep.subr.mxu0 0.0
  %65 = vmatpush1.msra.mxu0 0.0
  %66 = vmatprep.subr.mxu0 0.0
  %67 = vmatpush1.msra.mxu0 0.0
  %68 = vmatprep.subr.mxu0 0.0
  %69 = vmatpush1.msra.mxu0 0.0
  %70 = vmatprep.subr.mxu0 0.0
  %71 = vmatpush1.msra.mxu0 0.0
  %72 = vmatprep.subr.mxu0 0.0
  %73 = vmatpush1.msra.mxu0 %v36
  %74 = vmatprep.subr.mxu0 0.0
  %75 = vmatpush1.msra.mxu0 %v35
  %76 = vmatprep.subr.mxu0 0.0
  %77 = vmatpush1.msra.mxu0 %v34
  %78 = vmatprep.subr.mxu0 0.0
  %79 = vmatpush1.msra.mxu0 %v33
  %80 = vmatprep.subr.mxu0 0.0
  %81 = vmatpush2.msra.mxu0 0.0
  %82 = vmatprep.subr.mxu0 0.0
  %83 = vmatpush2.msra.mxu0 0.0
  %84 = vmatprep.subr.mxu0 0.0
  %85 = vmatpush2.msra.mxu0 0.0
  %86 = vmatprep.subr.mxu0 0.0
  %87 = vmatpush2.msra.mxu0 0.0
  %88 = vmatprep.subr.mxu0 0.0
  %89 = vmatpush2.msra.mxu0 0.0
  %90 = vmatprep.subr.mxu0 0.0
  %91 = vmatpush2.msra.mxu0 0.0
  %92 = vmatprep.subr.mxu0 0.0
  %93 = vmatpush2.msra.mxu0 0.0
  %94 = vmatprep.subr.mxu0 0.0
  %95 = vmatpush2.msra.mxu0 0.0
  %96 = vmatprep.subr.mxu0 0.0
  %97 = vmatpush2.msra.mxu0 0.0
  %98 = vmatprep.subr.mxu0 0.0
  %99 = vmatpush2.msra.mxu0 0.0
  %100 = vmatprep.subr.mxu0 0.0
  %101 = vmatpush2.msra.mxu0 0.0
  %102 = vmatprep.subr.mxu0 0.0
  %103 = vmatpush2.msra.mxu0 0.0
  %104 = vmatprep.subr.mxu0 0.0
  %105 = vmatpush2.msra.mxu0 0.0
  %106 = vmatprep.subr.mxu0 0.0
  %107 = vmatpush2.msra.mxu0 0.0
  %108 = vmatprep.subr.mxu0 0.0
  %109 = vmatpush2.msra.mxu0 0.0
  %110 = vmatprep.subr.mxu0 0.0
  %111 = vmatpush2.msra.mxu0 0.0
  %112 = vmatprep.mubr.f32.mxu0 0.0
  %113 = vmatmul.mubr.f32.gmra.mxu0 %v46
  %v114 = vpop.f32.mrf.mxu0
  %v115 = vadd.f32 %v42, %v114
  %v116 = vpop.f32.mrf.mxu0
  %117 = vdwg.mxu0
  %vm118 = vcmp.ge.f32.partialorder %v115, 0.0
  %v119 = vmul.f32 %v115, 0.01
  %v120 = vsel %vm118, %v115, %v119
  %v121 = vld [vmem:[%s3] sm:$0xff]
  %v122 = vld [vmem:[%s3 + $0x8] sm:$0xff]
  %v123 = vld [vmem:[%s3 + $0x10] sm:$0xff]
  %v124 = vld [vmem:[%s3 + $0x18] sm:$0xff]
  %v125 = vld [vmem:[%s3 + $0x20] sm:$0xff]
  %v126 = vld [vmem:[%s3 + $0x28] sm:$0xff]
  %v127 = vld [vmem:[%s3 + $0x30] sm:$0xff]
  %v128 = vld [vmem:[%s3 + $0x38] sm:$0xff]
  %v129 = vld [vmem:[%s3 + $0x40] sm:$0xff]
  %v130 = vld [vmem:[%s3 + $0x48] sm:$0xff]
  %v131 = vld [vmem:[%s3 + $0x50] sm:$0xff]
  %v132 = vld [vmem:[%s3 + $0x58] sm:$0xff]
  %v133 = vld [vmem:[%s3 + $0x60] sm:$0xff]
  %v134 = vld [vmem:[%s3 + $0x68] sm:$0xff]
  %v135 = vld [vmem:[%s3 + $0x70] sm:$0xff]
  %v136 = vld [vmem:[%s3 + $0x78] sm:$0xff]
  %v137 = vld [vmem:[%s4] sm:$0x1]
  %v139 = vlaneseq
  %v140 = vshrl.u32 %v139, 7
  %v141 = vsub.s32 0, %v140
  %v142 = vrot.slane %v137, %v141
  %144 = vmatprep.subr.mxu0 0.0
  %145 = vmatpush1.msra.mxu0 %v136
  %146 = vmatprep.subr.mxu0 0.0
  %147 = vmatpush1.msra.mxu0 %v135
  %148 = vmatprep.subr.mxu0 0.0
  %149 = vmatpush1.msra.mxu0 %v134
  %150 = vmatprep.subr.mxu0 0.0
  %151 = vmatpush1.msra.mxu0 %v133
  %152 = vmatprep.subr.mxu0 0.0
  %153 = vmatpush1.msra.mxu0 %v132
  %154 = vmatprep.subr.mxu0 0.0
  %155 = vmatpush1.msra.mxu0 %v131
  %156 = vmatprep.subr.mxu0 0.0
  %157 = vmatpush1.msra.mxu0 %v130
  %158 = vmatprep.subr.mxu0 0.0
  %159 = vmatpush1.msra.mxu0 %v129
  %160 = vmatprep.subr.mxu0 0.0
  %161 = vmatpush1.msra.mxu0 %v128
  %162 = vmatprep.subr.mxu0 0.0
  %163 = vmatpush1.msra.mxu0 %v127
  %164 = vmatprep.subr.mxu0 0.0
  %165 = vmatpush1.msra.mxu0 %v126
  %166 = vmatprep.subr.mxu0 0.0
  %167 = vmatpush1.msra.mxu0 %v125
  %168 = vmatprep.subr.mxu0 0.0
  %169 = vmatpush1.msra.mxu0 %v124
  %170 = vmatprep.subr.mxu0 0.0
  %171 = vmatpush1.msra.mxu0 %v123
  %172 = vmatprep.subr.mxu0 0.0
  %173 = vmatpush1.msra.mxu0 %v122
  %174 = vmatprep.subr.mxu0 0.0
  %175 = vmatpush1.msra.mxu0 %v121
  %176 = vmatprep.subr.mxu0 0.0
  %177 = vmatpush2.msra.mxu0 0.0
  %178 = vmatprep.subr.mxu0 0.0
  %179 = vmatpush2.msra.mxu0 0.0
  %180 = vmatprep.subr.mxu0 0.0
  %181 = vmatpush2.msra.mxu0 0.0
  %182 = vmatprep.subr.mxu0 0.0
  %183 = vmatpush2.msra.mxu0 0.0
  %184 = vmatprep.subr.mxu0 0.0
  %185 = vmatpush2.msra.mxu0 0.0
  %186 = vmatprep.subr.mxu0 0.0
  %187 = vmatpush2.msra.mxu0 0.0
  %188 = vmatprep.subr.mxu0 0.0
  %189 = vmatpush2.msra.mxu0 0.0
  %190 = vmatprep.subr.mxu0 0.0
  %191 = vmatpush2.msra.mxu0 0.0
  %192 = vmatprep.subr.mxu0 0.0
  %193 = vmatpush2.msra.mxu0 0.0
  %194 = vmatprep.subr.mxu0 0.0
  %195 = vmatpush2.msra.mxu0 0.0
  %196 = vmatprep.subr.mxu0 0.0
  %197 = vmatpush2.msra.mxu0 0.0
  %198 = vmatprep.subr.mxu0 0.0
  %199 = vmatpush2.msra.mxu0 0.0
  %200 = vmatprep.subr.mxu0 0.0
  %201 = vmatpush2.msra.mxu0 0.0
  %202 = vmatprep.subr.mxu0 0.0
  %203 = vmatpush2.msra.mxu0 0.0
  %204 = vmatprep.subr.mxu0 0.0
  %205 = vmatpush2.msra.mxu0 0.0
  %206 = vmatprep.subr.mxu0 0.0
  %207 = vmatpush2.msra.mxu0 0.0
  %208 = vmatprep.mubr.f32.mxu0 0.0
  %209 = vmatmul.mubr.f32.gmra.mxu0 %v120
  %v210 = vpop.f32.mrf.mxu0
  %v211 = vadd.f32 %v142, %v210
  %v212 = vpop.f32.mrf.mxu0
  %213 = vdwg.mxu0
  %vm214 = vcmp.ge.f32.partialorder %v211, 0.0
  %v215 = vmul.f32 %v211, 0.01
  %v216 = vsel %vm214, %v211, %v215
  %v217 = vld [vmem:[%s5] sm:$0xff]
  %v218 = vld [vmem:[%s5 + $0x8] sm:$0xff]
  %v219 = vld [vmem:[%s5 + $0x10] sm:$0xff]
  %v220 = vld [vmem:[%s5 + $0x18] sm:$0xff]
  %v221 = vld [vmem:[%s5 + $0x20] sm:$0xff]
  %v222 = vld [vmem:[%s5 + $0x28] sm:$0xff]
  %v223 = vld [vmem:[%s5 + $0x30] sm:$0xff]
  %v224 = vld [vmem:[%s5 + $0x38] sm:$0xff]
  %v225 = vld [vmem:[%s6] sm:$0x1]
  %v227 = vlaneseq
  %v228 = vshrl.u32 %v227, 7
  %v229 = vsub.s32 0, %v228
  %v230 = vrot.slane %v225, %v229
  %vm232 = vcmask 523264
  %v234 = vsel %vm232, %v216, 0
  %236 = vmatprep.subr.mxu0 0.0
  %237 = vmatpush1.msra.mxu0 0.0
  %238 = vmatprep.subr.mxu0 0.0
  %239 = vmatpush1.msra.mxu0 0.0
  %240 = vmatprep.subr.mxu0 0.0
  %241 = vmatpush1.msra.mxu0 0.0
  %242 = vmatprep.subr.mxu0 0.0
  %243 = vmatpush1.msra.mxu0 0.0
  %244 = vmatprep.subr.mxu0 0.0
  %245 = vmatpush1.msra.mxu0 0.0
  %246 = vmatprep.subr.mxu0 0.0
  %247 = vmatpush1.msra.mxu0 0.0
  %248 = vmatprep.subr.mxu0 0.0
  %249 = vmatpush1.msra.mxu0 0.0
  %250 = vmatprep.subr.mxu0 0.0
  %251 = vmatpush1.msra.mxu0 0.0
  %252 = vmatprep.subr.mxu0 0.0
  %253 = vmatpush1.msra.mxu0 %v224
  %254 = vmatprep.subr.mxu0 0.0
  %255 = vmatpush1.msra.mxu0 %v223
  %256 = vmatprep.subr.mxu0 0.0
  %257 = vmatpush1.msra.mxu0 %v222
  %258 = vmatprep.subr.mxu0 0.0
  %259 = vmatpush1.msra.mxu0 %v221
  %260 = vmatprep.subr.mxu0 0.0
  %261 = vmatpush1.msra.mxu0 %v220
  %262 = vmatprep.subr.mxu0 0.0
  %263 = vmatpush1.msra.mxu0 %v219
  %264 = vmatprep.subr.mxu0 0.0
  %265 = vmatpush1.msra.mxu0 %v218
  %266 = vmatprep.subr.mxu0 0.0
  %267 = vmatpush1.msra.mxu0 %v217
  %268 = vmatprep.subr.mxu0 0.0
  %269 = vmatpush2.msra.mxu0 0.0
  %270 = vmatprep.subr.mxu0 0.0
  %271 = vmatpush2.msra.mxu0 0.0
  %272 = vmatprep.subr.mxu0 0.0
  %273 = vmatpush2.msra.mxu0 0.0
  %274 = vmatprep.subr.mxu0 0.0
  %275 = vmatpush2.msra.mxu0 0.0
  %276 = vmatprep.subr.mxu0 0.0
  %277 = vmatpush2.msra.mxu0 0.0
  %278 = vmatprep.subr.mxu0 0.0
  %279 = vmatpush2.msra.mxu0 0.0
  %280 = vmatprep.subr.mxu0 0.0
  %281 = vmatpush2.msra.mxu0 0.0
  %282 = vmatprep.subr.mxu0 0.0
  %283 = vmatpush2.msra.mxu0 0.0
  %284 = vmatprep.subr.mxu0 0.0
  %285 = vmatpush2.msra.mxu0 0.0
  %286 = vmatprep.subr.mxu0 0.0
  %287 = vmatpush2.msra.mxu0 0.0
  %288 = vmatprep.subr.mxu0 0.0
  %289 = vmatpush2.msra.mxu0 0.0
  %290 = vmatprep.subr.mxu0 0.0
  %291 = vmatpush2.msra.mxu0 0.0
  %292 = vmatprep.subr.mxu0 0.0
  %293 = vmatpush2.msra.mxu0 0.0
  %294 = vmatprep.subr.mxu0 0.0
  %295 = vmatpush2.msra.mxu0 0.0
  %296 = vmatprep.subr.mxu0 0.0
  %297 = vmatpush2.msra.mxu0 0.0
  %298 = vmatprep.subr.mxu0 0.0
  %299 = vmatpush2.msra.mxu0 0.0
  %300 = vmatprep.mubr.f32.mxu0 0.0
  %301 = vmatmul.mubr.f32.gmra.mxu0 %v234
  %v302 = vpop.f32.mrf.mxu0
  %v303 = vadd.f32 %v230, %v302
  %v304 = vpop.f32.mrf.mxu0
  %305 = vdwg.mxu0
  %vm306 = vcmp.ge.f32.partialorder %v303, 0.0
  %v307 = vmul.f32 %v303, 0.01
  %v308 = vsel %vm306, %v303, %v307
  %v309 = vld [vmem:[%s7] sm:$0xff]
  %v310 = vld [vmem:[%s7 + $0x8] sm:$0xff]
  %v311 = vld [vmem:[%s7 + $0x10] sm:$0xff]
  %v312 = vld [vmem:[%s7 + $0x18] sm:$0xff]
  %v313 = vld [vmem:[%s8] sm:$0x1]
  %v315 = vlaneseq
  %v316 = vshrl.u32 %v315, 7
  %v317 = vsub.s32 0, %v316
  %v318 = vrot.slane %v313, %v317
  %v321 = vsel %vm44, %v308, 0
  %323 = vmatprep.subr.mxu0 0.0
  %324 = vmatpush1.msra.mxu0 0.0
  %325 = vmatprep.subr.mxu0 0.0
  %326 = vmatpush1.msra.mxu0 0.0
  %327 = vmatprep.subr.mxu0 0.0
  %328 = vmatpush1.msra.mxu0 0.0
  %329 = vmatprep.subr.mxu0 0.0
  %330 = vmatpush1.msra.mxu0 0.0
  %331 = vmatprep.subr.mxu0 0.0
  %332 = vmatpush1.msra.mxu0 0.0
  %333 = vmatprep.subr.mxu0 0.0
  %334 = vmatpush1.msra.mxu0 0.0
  %335 = vmatprep.subr.mxu0 0.0
  %336 = vmatpush1.msra.mxu0 0.0
  %337 = vmatprep.subr.mxu0 0.0
  %338 = vmatpush1.msra.mxu0 0.0
  %339 = vmatprep.subr.mxu0 0.0
  %340 = vmatpush1.msra.mxu0 0.0
  %341 = vmatprep.subr.mxu0 0.0
  %342 = vmatpush1.msra.mxu0 0.0
  %343 = vmatprep.subr.mxu0 0.0
  %344 = vmatpush1.msra.mxu0 0.0
  %345 = vmatprep.subr.mxu0 0.0
  %346 = vmatpush1.msra.mxu0 0.0
  %347 = vmatprep.subr.mxu0 0.0
  %348 = vmatpush1.msra.mxu0 %v312
  %349 = vmatprep.subr.mxu0 0.0
  %350 = vmatpush1.msra.mxu0 %v311
  %351 = vmatprep.subr.mxu0 0.0
  %352 = vmatpush1.msra.mxu0 %v310
  %353 = vmatprep.subr.mxu0 0.0
  %354 = vmatpush1.msra.mxu0 %v309
  %355 = vmatprep.subr.mxu0 0.0
  %356 = vmatpush2.msra.mxu0 0.0
  %357 = vmatprep.subr.mxu0 0.0
  %358 = vmatpush2.msra.mxu0 0.0
  %359 = vmatprep.subr.mxu0 0.0
  %360 = vmatpush2.msra.mxu0 0.0
  %361 = vmatprep.subr.mxu0 0.0
  %362 = vmatpush2.msra.mxu0 0.0
  %363 = vmatprep.subr.mxu0 0.0
  %364 = vmatpush2.msra.mxu0 0.0
  %365 = vmatprep.subr.mxu0 0.0
  %366 = vmatpush2.msra.mxu0 0.0
  %367 = vmatprep.subr.mxu0 0.0
  %368 = vmatpush2.msra.mxu0 0.0
  %369 = vmatprep.subr.mxu0 0.0
  %370 = vmatpush2.msra.mxu0 0.0
  %371 = vmatprep.subr.mxu0 0.0
  %372 = vmatpush2.msra.mxu0 0.0
  %373 = vmatprep.subr.mxu0 0.0
  %374 = vmatpush2.msra.mxu0 0.0
  %375 = vmatprep.subr.mxu0 0.0
  %376 = vmatpush2.msra.mxu0 0.0
  %377 = vmatprep.subr.mxu0 0.0
  %378 = vmatpush2.msra.mxu0 0.0
  %379 = vmatprep.subr.mxu0 0.0
  %380 = vmatpush2.msra.mxu0 0.0
  %381 = vmatprep.subr.mxu0 0.0
  %382 = vmatpush2.msra.mxu0 0.0
  %383 = vmatprep.subr.mxu0 0.0
  %384 = vmatpush2.msra.mxu0 0.0
  %385 = vmatprep.subr.mxu0 0.0
  %386 = vmatpush2.msra.mxu0 0.0
  %387 = vmatprep.mubr.f32.mxu0 0.0
  %388 = vmatmul.mubr.f32.gmra.mxu0 %v321
  %v389 = vpop.f32.mrf.mxu0
  %v390 = vadd.f32 %v318, %v389
  %v391 = vpop.f32.mrf.mxu0
  %392 = vdwg.mxu0
  %vm393 = vcmask 23552
  %394 = vst.msk [vmem:[%s9] sm:$0xff] %vm393, %v390
  // Predicated region
  $region38: #{rule_augmented_mlp.1} parent=0 // pred_check
    _
  $region39: #{rule_augmented_mlp.1} parent=0 // pred_check_branch
    %396 = sbr.rel (0) target = $region41
  $region40: #{rule_augmented_mlp.1} parent=0 // pred_region
    _
  $region41: #{rule_augmented_mlp.1} parent=0 // pred_fallthru
    _
  // Predicated region
  $region42: #{rule_augmented_mlp.1} parent=0 // pred_check
    _
  $region43: #{rule_augmented_mlp.1} parent=0 // pred_check_branch
    %398 = sbr.rel (0) target = $region45
  $region44: #{rule_augmented_mlp.1} parent=0 // pred_region
    _
  $region45: #{rule_augmented_mlp.1} parent=0 // pred_fallthru
    _

</llo_original>
